<compile_context>
chip_gen: v6e
topology: v6e:2x2x1
jax: 0.10.0
libtpu: 0.0.40
codegen_flags: <defaults>
</compile_context>

<pallas_src>
import math
import numpy as np
import jax
import jax.numpy as jnp
from jax.experimental import pallas as pl
from jax.experimental.pallas import tpu as pltpu


def build_position_matrix(max_sequence_len: int, embed_dim: int) -> np.ndarray:
    """Exact port of the PyTorch __init__ loops (keeps the reference's
    non-canonical exponent: raw even index i, and 2*(i+1)/embed_dim for cos)."""
    if embed_dim % 2 != 0:
        raise ValueError("embed_dim must be even (reference writes pm[pos, i+1]).")
    pm = np.zeros((max_sequence_len, embed_dim), dtype=np.float32)
    for pos in range(max_sequence_len):
        for i in range(0, embed_dim, 2):
            pm[pos, i] = math.sin(pos / 10000 ** (2 * i / embed_dim))
            pm[pos, i + 1] = math.cos(pos / 10000 ** (2 * (i + 1) / embed_dim))
    return pm


def _add_pe_kernel(x_ref, pe_ref, o_ref):
    # x_ref / o_ref: (TB, TN) lane-dense tile; pe_ref: (1, TN) (sublane broadcast).
    o_ref[...] = x_ref[...] + pe_ref[...]


def positional_encoding_forward(x: jax.Array, position_matrix: jax.Array) -> jax.Array:
    """x: (B, S, D); position_matrix: (max_seq, D). Returns x + pe[:S] broadcast over B."""
    B, S, D = x.shape
    max_seq, pe_d = position_matrix.shape
    if S > max_seq:
        raise ValueError(f"sequence_len {S} exceeds max_sequence_len {max_seq}")
    if D != pe_d:
        raise ValueError(f"embed_dim mismatch: x has {D}, position_matrix has {pe_d}")

    # Match pe dtype to x dtype (avoids mixed-dtype add / extra HBM traffic).
    pe = position_matrix[:S, :].astype(x.dtype)

    # Lane-dense 2D views: fuse (S, D) into one trailing axis.
    N = S * D
    x2 = x.reshape(B, N)
    pe2 = pe.reshape(1, N)

    # --- tile selection (generic; for the small test case this collapses to a
    # single block and grid = (1, 1)) ---------------------------------------
    # Column (fused S*D) tile: keep full if small; halve while it stays a
    # multiple of 128 and an exact divisor of N.
    MAX_COL_ELEMS = 128 * 1024          # 512 KiB f32 per row of the tile
    tn = N
    while tn > MAX_COL_ELEMS and tn % 256 == 0:
        tn //= 2

    # Row (batch) tile: full batch unless it is large; keep tb a multiple of 8
    # that divides B, and keep tb*tn under ~2 MiB f32 so double-buffered
    # in+out tiles fit comfortably even under v5e's 16 MiB scoped VMEM default.
    MAX_TILE_ELEMS = 512 * 1024
    tb = B
    if B * tn > MAX_TILE_ELEMS and B % 8 == 0:
        tb = 8
        while B % (tb * 2) == 0 and (tb * 2) * tn <= MAX_TILE_ELEMS:
            tb *= 2

    grid = (N // tn, B // tb)  # batch is the LAST (innermost) axis -> pe block
    #                            index is constant across consecutive steps and
    #                            its DMA is skipped (fetched N/tn times, not B*N/tn).

    out2 = pl.pallas_call(
        _add_pe_kernel,
        out_shape=jax.ShapeDtypeStruct((B, N), x.dtype),
        grid_spec=pltpu.PrefetchScalarGridSpec(
            num_scalar_prefetch=0,
            grid=grid,
            in_specs=[
                pl.BlockSpec((tb, tn), lambda j, b: (b, j)),
                pl.BlockSpec((1, tn), lambda j, b: (0, j)),
            ],
            out_specs=pl.BlockSpec((tb, tn), lambda j, b: (b, j)),
        ),
        compiler_params=pltpu.CompilerParams(
            # Both axes are fully independent (pure elementwise add).
            dimension_semantics=("parallel", "parallel"),
        ),
    )(x2, pe2)

    return out2.reshape(B, S, D)


if __name__ == "__main__":
    # Module config: max_sequence_len=16, embed_dim=32; input (batch=2, seq=8, embed=32).
    max_sequence_len = 16
    embed_dim = 32
    batch = 2
    seq = 8

    position_matrix = jnp.asarray(build_position_matrix(max_sequence_len, embed_dim))

    key = jax.random.PRNGKey(0)
    x = jax.random.normal(key, (batch, seq, embed_dim), dtype=jnp.float32)

    out = positional_encoding_forward(x, position_matrix)
    out = jax.block_until_ready(out)

    # Reference check in plain JAX
    ref = x + position_matrix[None, :seq, :]
    np.testing.assert_allclose(np.asarray(out), np.asarray(ref), rtol=1e-6, atol=1e-6)

    print("KERNEL_OK")
</pallas_src>

<mosaic_0001>
module attributes {stable_mosaic.version = 11 : i64} {
  func.func @_add_pe_kernel(%arg0: i32, %arg1: i32, %arg2: memref<2x256xf32, #tpu.memory_space<vmem>>, %arg3: memref<1x256xf32, #tpu.memory_space<vmem>>, %arg4: memref<2x256xf32, #tpu.memory_space<vmem>>) attributes {dimension_semantics = [#tpu.dimension_semantics<parallel>, #tpu.dimension_semantics<parallel>], iteration_bounds = array<i64: 1, 1>, scalar_prefetch = 0 : i64, scratch_operands = 0 : i64, tpu.core_type = #tpu.core_type<tc>, window_params = [{transform_indices = @transform_0, window_bounds = array<i64: 2, 256>}, {transform_indices = @transform_1, window_bounds = array<i64: 1, 256>}, {transform_indices = @transform_2, window_bounds = array<i64: 2, 256>}]} {
    %c0 = arith.constant 0 : index
    %c0_0 = arith.constant 0 : index
    %0 = vector.load %arg2[%c0, %c0_0] : memref<2x256xf32, #tpu.memory_space<vmem>>, vector<2x256xf32>
    %c0_1 = arith.constant 0 : index
    %c0_2 = arith.constant 0 : index
    %1 = vector.load %arg3[%c0_1, %c0_2] : memref<1x256xf32, #tpu.memory_space<vmem>>, vector<1x256xf32>
    %2 = vector.broadcast %1 : vector<1x256xf32> to vector<2x256xf32>
    %3 = arith.addf %0, %2 : vector<2x256xf32>
    %c0_3 = arith.constant 0 : index
    %c0_4 = arith.constant 0 : index
    %4 = vector.load %arg4[%c0_3, %c0_4] : memref<2x256xf32, #tpu.memory_space<vmem>>, vector<2x256xf32>
    tpu.vector_store %arg4[%c0_3, %c0_4], %3 {strides = array<i32>} : memref<2x256xf32, #tpu.memory_space<vmem>>, vector<2x256xf32>,
    return
  }
  func.func @transform_0(%arg0: i32, %arg1: i32) -> (i32, i32) {
    %c0_i32 = arith.constant 0 : i32
    return %arg1, %arg0 : i32, i32
  }
  func.func @transform_1(%arg0: i32, %arg1: i32) -> (i32, i32) {
    %c0_i32 = arith.constant 0 : i32
    %c0_i32_0 = arith.constant 0 : i32
    return %c0_i32, %arg0 : i32, i32
  }
  func.func @transform_2(%arg0: i32, %arg1: i32) -> (i32, i32) {
    %c0_i32 = arith.constant 0 : i32
    return %arg1, %arg0 : i32, i32
  }
}

</mosaic_0001>

<llo_original>
// kernel: tpu_custom_call.1
$region0: #{tpu_custom_call.1}
  #allocation0 [shape = 'u32[]', space=smem, size = 0x4, offset = 0x4, fixed_abs, tag = 'smem constant byte address 0x4 - core index']
  #allocation1 [shape = 'u32[144,128]{1,0:T(1,128)}', space=vmem, size = 0x12000, scoped, tag = 'internal scratch']
  %s0 = inlined_call_operand.hbm [shape: f32[2,256], index: 0, kind: input, shape index: {}]
  %s1 = inlined_call_operand.hbm [shape: f32[1,256], index: 1, kind: input, shape index: {}]
  %s2 = inlined_call_operand.hbm [shape: f32[2,256], index: 2, kind: output, shape index: {}]
  %s3 = sld [smem:[#allocation0]]
  $region26: #{tpu_custom_call.1} parent=0
    _
  %s5 = ssub.s32 1, %s3
  %s6 = scalar_select 0, %s5, %s3
  $region1: #{tpu_custom_call.1} parent=0
    #allocation2 [shape = 'u8[2048]{0}', space=vmem, size = 0x800, scoped, tag = 'input window, operand 0, single buffered']
    #allocation3 [shape = 's32[1]{0}', space=sflag, size = 0x4, scoped, tag = 'scoped memory for tpu_custom_call.1']
    #allocation4 [shape = 's32[1]{0}', space=sflag, size = 0x4, scoped, tag = 'scoped memory for tpu_custom_call.1']
    #allocation5 [shape = 'u8[1024]{0}', space=vmem, size = 0x400, scoped, tag = 'input window, operand 1, single buffered']
    #allocation6 [shape = 's32[1]{0}', space=sflag, size = 0x4, scoped, tag = 'scoped memory for tpu_custom_call.1']
    #allocation7 [shape = 'u8[2048]{0}', space=vmem, size = 0x800, scoped, tag = 'output window, operand 0, single buffered']
    %7 = vsyncpa [#allocation3], 0
    %8 = vsyncpa [#allocation6], 0
    %9 = vsyncpa [#allocation4], 0
    // Predicated region
    $region2: #{tpu_custom_call.1} parent=1 // pred_check
      _
    $region3: #{tpu_custom_call.1} parent=1 // pred_check_branch
      %11 = sbr.rel (0) target = $region5
    $region4: #{tpu_custom_call.1} parent=1 // pred_region
      %s13 = ssub.s32 64, 64
      %14 = vsyncadd [#allocation3], %s13
      %s16 = sshll.u32 [#allocation2], 4
      %s17 = int_to_ptr.vmem [resolvable:$true] %s16
      %19 = dma.hbm_to_vmem [thread:$0]  %s0, 64, %s17, [#allocation3]
    $region5: #{tpu_custom_call.1} parent=1 // pred_fallthru
      _
    // Predicated region
    $region6: #{tpu_custom_call.1} parent=1 // pred_check
      _
    $region7: #{tpu_custom_call.1} parent=1 // pred_check_branch
      %21 = sbr.rel (0) target = $region9
    $region8: #{tpu_custom_call.1} parent=1 // pred_region
      %s23 = ssub.s32 32, 32
      %24 = vsyncadd [#allocation6], %s23
      %s26 = sshll.u32 [#allocation5], 4
      %s27 = int_to_ptr.vmem [resolvable:$true] %s26
      %29 = dma.hbm_to_vmem [thread:$0]  %s1, 32, %s27, [#allocation6]
    $region9: #{tpu_custom_call.1} parent=1 // pred_fallthru
      _
    // Predicated region
    $region10: #{tpu_custom_call.1} parent=1 // pred_check
      _
    $region11: #{tpu_custom_call.1} parent=1 // pred_check_branch
      %31 = sbr.rel (0) target = $region13
    $region12: #{tpu_custom_call.1} parent=1 // pred_region
      %32 = dma.done [#allocation3], 64
    $region13: #{tpu_custom_call.1} parent=1 // pred_fallthru
      _
    // Predicated region
    $region14: #{tpu_custom_call.1} parent=1 // pred_check
      _
    $region15: #{tpu_custom_call.1} parent=1 // pred_check_branch
      %34 = sbr.rel (0) target = $region17
    $region16: #{tpu_custom_call.1} parent=1 // pred_region
      %35 = dma.done [#allocation6], 32
    $region17: #{tpu_custom_call.1} parent=1 // pred_fallthru
      _
    %v36 = vld [vmem:[#allocation2] sm:$0xf]
    %v37 = vld [vmem:[#allocation5] sm:$0x3]
    %v39 = vlaneseq
    %v40 = vshrl.u32 %v39, 7
    %v41 = vsub.s32 0, %v40
    %v42 = vrot.slane %v37, %v41
    %v43 = vlaneseq
    %v44 = vshrl.u32 %v43, 7
    %v45 = vsub.s32 1, %v44
    %v46 = vrot.slane %v37, %v45
    %v47 = vcombine.low %v42, %v46
    %v49 = vunpack.c.l.s4 1983009808
    %v50 = vunpack.c.0.s8 %v49
    %v51 = vlaneseq
    %v52 = vshrl.u32 %v51, 7
    %v53 = vsub.s32 %v50, %v52
    %v54 = vrot.slane %v47, %v53
    %v56 = vadd.f32 %v36, %v54
    %57 = vst [vmem:[#allocation7] sm:$0xf] %v56
    // Predicated region
    $region18: #{tpu_custom_call.1} parent=1 // pred_check
      _
    $region19: #{tpu_custom_call.1} parent=1 // pred_check_branch
      %59 = sbr.rel (0) target = $region21
    $region20: #{tpu_custom_call.1} parent=1 // pred_region
      %s61 = ssub.s32 64, 64
      %62 = vsyncadd [#allocation4], %s61
      %s64 = sshll.u32 [#allocation7], 4
      %s65 = int_to_ptr.vmem [resolvable:$true] %s64
      %67 = dma.vmem_to_hbm [thread:$0]  %s65, 64, %s2, [#allocation4]
    $region21: #{tpu_custom_call.1} parent=1 // pred_fallthru
      _
    // Predicated region
    $region22: #{tpu_custom_call.1} parent=1 // pred_check
      _
    $region23: #{tpu_custom_call.1} parent=1 // pred_check_branch
      %69 = sbr.rel (0) target = $region25
    $region24: #{tpu_custom_call.1} parent=1 // pred_region
      %70 = dma.done [#allocation4], 64
    $region25: #{tpu_custom_call.1} parent=1 // pred_fallthru
      _
    %71 = vsyncpa [#allocation3], 1
    %72 = vsyncpa [#allocation6], 1
    %73 = vsyncpa [#allocation4], 1

</llo_original>
